<compile_context>
chip_gen: v7x
topology: tpu7x:2x2x1
jax: 0.10.0
libtpu: 0.0.40
codegen_flags: <defaults>
</compile_context>

<pallas_src>
import jax
import jax.numpy as jnp
from jax import lax
from jax.experimental import pallas as pl
from jax.experimental.pallas import tpu as pltpu


def reinforce_fcnn_kernel(x_ref, w1_ref, b1_ref, w2_ref, b2_ref,
                          w3_ref, b3_ref, out_ref):
    """Fused MLP forward for one batch tile.

    x_ref   : (TILE_B, state_dim)   natural row-major input block
    wN_ref  : (out, in)             PyTorch nn.Linear layout, VMEM-resident
    bN_ref  : (out, 1)              column bias (broadcasts across batch lanes)
    out_ref : (TILE_B, action_dim)  natural row-major output block
    """
    x = x_ref[...]

    # Relayout is folded into the matmul: contract x's last dim against w1's
    # last dim so activations come out batch-on-lanes, (features, TILE_B).
    h1 = lax.dot_general(w1_ref[...], x, (((1,), (1,)), ((), ())),
                         preferred_element_type=jnp.float32) + b1_ref[...]
    h1 = jnp.maximum(h1, 0.0)

    h2 = jnp.dot(w2_ref[...], h1, preferred_element_type=jnp.float32) + b2_ref[...]
    h2 = jnp.maximum(h2, 0.0)

    logits = jnp.dot(w3_ref[...], h2, preferred_element_type=jnp.float32) + b3_ref[...]

    # Numerically stable softmax along the feature axis (axis 0), per batch lane.
    m = jnp.max(logits, axis=0, keepdims=True)
    e = jnp.exp(logits - m)
    denom = jnp.sum(e, axis=0, keepdims=True)
    probs = e / denom          # exact divide: each row sums to 1 (f32 rounding)

    # Small (action_dim, TILE_B) -> (TILE_B, action_dim) in-kernel transpose so
    # the output is stored directly in the module's natural [B, action_dim]
    # layout (no separate HBM transpose pass in the wrapper).
    out_ref[...] = probs.T.astype(out_ref.dtype)


def _round_up(v, m):
    return ((v + m - 1) // m) * m


def reinforce_fcnn_forward(x, params, tile_b=8192):
    """x: [B, state_dim] float32. Returns softmax probs [B, action_dim]."""
    w1, b1, w2, b2, w3, b3 = params
    B, state_dim = x.shape
    hidden1 = w1.shape[0]
    hidden2 = w2.shape[0]
    action_dim = w3.shape[0]

    # ---- batch tile selection --------------------------------------------
    # The batch sits on the MXU lane axis inside the kernel -> multiple of 128.
    # 8192 lanes keeps the VMEM footprint ~5 MiB (safe on every generation's
    # default scoped budget); tile_b up to 16384 is still fine on v5e, larger
    # needs a vmem_limit_bytes override.
    tile_b = max(128, (min(int(tile_b), 32768) // 128) * 128)
    n_tiles = pl.cdiv(B, tile_b)
    if n_tiles == 1 and B > 4096:
        n_tiles = 2          # mid-size batches: give both v7x TensorCores a tile
    tile = min(tile_b, _round_up(pl.cdiv(B, n_tiles), 128))

    # Large batches: no padding pass -- the grid just has a ragged last block.
    # Only sub-tile batches are padded (a few KiB) so the single block is legal
    # and all in-kernel shapes stay (8,128)-aligned.
    x_in = x if B >= tile else jnp.pad(x, ((0, tile - B), (0, 0)))
    rows = x_in.shape[0]
    grid = (pl.cdiv(rows, tile),)

    n_params = sum(int(p.size) for p in params)
    cost = pl.CostEstimate(
        flops=2 * rows * (state_dim * hidden1 + hidden1 * hidden2
                          + hidden2 * action_dim),
        transcendentals=rows * action_dim,
        bytes_accessed=4 * (rows * (state_dim + action_dim) + n_params),
    )

    const = lambda i: (0, 0)   # weights/biases stay VMEM-resident across steps

    out = pl.pallas_call(
        reinforce_fcnn_kernel,
        out_shape=jax.ShapeDtypeStruct((rows, action_dim), jnp.float32),
        grid=grid,
        in_specs=[
            pl.BlockSpec((tile, state_dim), lambda i: (i, 0)),
            pl.BlockSpec(w1.shape, const), pl.BlockSpec(b1.shape, const),
            pl.BlockSpec(w2.shape, const), pl.BlockSpec(b2.shape, const),
            pl.BlockSpec(w3.shape, const), pl.BlockSpec(b3.shape, const),
        ],
        out_specs=pl.BlockSpec((tile, action_dim), lambda i: (i, 0)),
        compiler_params=pltpu.CompilerParams(
            # Batch tiles are independent: shard across TensorCores (v7x).
            dimension_semantics=("parallel",)),
        cost_estimate=cost,
    )(x_in, w1, b1, w2, b2, w3, b3)

    return out[:B]


def init_params(key, state_dim, action_dim, hidden1, hidden2):
    """Deterministic init mimicking nn.Linear (uniform +/- 1/sqrt(fan_in)).
    Weights kept in PyTorch [out, in] layout; biases as [out, 1] columns."""
    ks = jax.random.split(key, 6)

    def linear(kw, kb, fan_in, fan_out):
        bound = 1.0 / float(fan_in) ** 0.5
        w = jax.random.uniform(kw, (fan_out, fan_in), jnp.float32, -bound, bound)
        b = jax.random.uniform(kb, (fan_out, 1), jnp.float32, -bound, bound)
        return w, b

    w1, b1 = linear(ks[0], ks[1], state_dim, hidden1)
    w2, b2 = linear(ks[2], ks[3], hidden1, hidden2)
    w3, b3 = linear(ks[4], ks[5], hidden2, action_dim)
    return (w1, b1, w2, b2, w3, b3)


def reference_forward(x, params):
    w1, b1, w2, b2, w3, b3 = params
    h1 = jax.nn.relu(x @ w1.T + b1[:, 0])
    h2 = jax.nn.relu(h1 @ w2.T + b2[:, 0])
    return jax.nn.softmax(h2 @ w3.T + b3[:, 0], axis=-1)


if __name__ == "__main__":
    # Small shapes consistent with the module's forward.
    state_dim, action_dim, hidden1, hidden2 = 16, 8, 32, 32
    batch = 4

    key = jax.random.PRNGKey(0)
    k_x, k_p = jax.random.split(key)
    x = jax.random.normal(k_x, (batch, state_dim), dtype=jnp.float32)
    params = init_params(k_p, state_dim, action_dim, hidden1, hidden2)

    total_params = sum(int(p.size) for p in params)
    print(f"Total number of parameters: {total_params}")
    print(f"Total number of trainable parameters: {total_params}")

    out = jax.block_until_ready(reinforce_fcnn_forward(x, params))
    ref = reference_forward(x, params)
    assert out.shape == (batch, action_dim)
    # Default jnp.dot precision rounds f32 operands to bf16 on the MXU, so
    # allow ~1e-2 vs the exact f32 reference (interpret mode is exact).
    assert jnp.allclose(out, ref, atol=1e-2, rtol=1e-2)
    # Exact divide in the kernel -> rows sum to 1 within f32 rounding.
    assert jnp.allclose(jnp.sum(out, axis=-1), jnp.ones((batch,)), atol=1e-4)

    # Also exercise the multi-tile grid + ragged-last-block path.
    x_big = jax.random.normal(jax.random.PRNGKey(1), (600, state_dim), jnp.float32)
    out_big = jax.block_until_ready(
        reinforce_fcnn_forward(x_big, params, tile_b=256))
    ref_big = reference_forward(x_big, params)
    assert out_big.shape == (600, action_dim)
    assert jnp.allclose(out_big, ref_big, atol=1e-2, rtol=1e-2)
    assert jnp.allclose(jnp.sum(out_big, axis=-1), jnp.ones((600,)), atol=1e-4)

    print("KERNEL_OK")
</pallas_src>

<mosaic_0001>
module attributes {stable_mosaic.version = 11 : i64} {
  func.func @reinforce_fcnn_kernel(%arg0: i32, %arg1: memref<128x16xf32, #tpu.memory_space<vmem>>, %arg2: memref<32x16xf32, #tpu.memory_space<vmem>>, %arg3: memref<32x1xf32, #tpu.memory_space<vmem>>, %arg4: memref<32x32xf32, #tpu.memory_space<vmem>>, %arg5: memref<32x1xf32, #tpu.memory_space<vmem>>, %arg6: memref<8x32xf32, #tpu.memory_space<vmem>>, %arg7: memref<8x1xf32, #tpu.memory_space<vmem>>, %arg8: memref<128x8xf32, #tpu.memory_space<vmem>>) attributes {dimension_semantics = [#tpu.dimension_semantics<parallel>], iteration_bounds = array<i64: 1>, scalar_prefetch = 0 : i64, scratch_operands = 0 : i64, tpu.core_type = #tpu.core_type<tc>, window_params = [{transform_indices = @transform_0, window_bounds = array<i64: 128, 16>}, {pipeline_mode = #tpu.pipeline_mode<synchronous>, transform_indices = @transform_1, window_bounds = array<i64: 32, 16>}, {pipeline_mode = #tpu.pipeline_mode<synchronous>, transform_indices = @transform_2, window_bounds = array<i64: 32, 1>}, {pipeline_mode = #tpu.pipeline_mode<synchronous>, transform_indices = @transform_3, window_bounds = array<i64: 32, 32>}, {pipeline_mode = #tpu.pipeline_mode<synchronous>, transform_indices = @transform_4, window_bounds = array<i64: 32, 1>}, {pipeline_mode = #tpu.pipeline_mode<synchronous>, transform_indices = @transform_5, window_bounds = array<i64: 8, 32>}, {pipeline_mode = #tpu.pipeline_mode<synchronous>, transform_indices = @transform_6, window_bounds = array<i64: 8, 1>}, {transform_indices = @transform_7, window_bounds = array<i64: 128, 8>}]} {
    %c0 = arith.constant 0 : index
    %c0_0 = arith.constant 0 : index
    %0 = vector.load %arg1[%c0, %c0_0] : memref<128x16xf32, #tpu.memory_space<vmem>>, vector<128x16xf32>
    %c0_1 = arith.constant 0 : index
    %c0_2 = arith.constant 0 : index
    %1 = vector.load %arg2[%c0_1, %c0_2] : memref<32x16xf32, #tpu.memory_space<vmem>>, vector<32x16xf32>
    %cst = arith.constant dense<0.000000e+00> : vector<32x128xf32>
    %2 = tpu.matmul %1, %0, %cst {dimension_numbers = #tpu.dot_dimension_numbers<[1], [1], [0], [0], [0, 0, 1, 0], [], []>} : vector<32x16xf32>, vector<128x16xf32>, vector<32x128xf32> -> vector<32x128xf32>
    %c0_3 = arith.constant 0 : index
    %c0_4 = arith.constant 0 : index
    %3 = vector.load %arg3[%c0_3, %c0_4] : memref<32x1xf32, #tpu.memory_space<vmem>>, vector<32x1xf32>
    %4 = vector.broadcast %3 : vector<32x1xf32> to vector<32x128xf32>
    %5 = arith.addf %2, %4 : vector<32x128xf32>
    %cst_5 = arith.constant 0.000000e+00 : f32
    %6 = vector.broadcast %cst_5 : f32 to vector<32x128xf32>
    %7 = arith.maximumf %5, %6 : vector<32x128xf32>
    %c0_6 = arith.constant 0 : index
    %c0_7 = arith.constant 0 : index
    %8 = vector.load %arg4[%c0_6, %c0_7] : memref<32x32xf32, #tpu.memory_space<vmem>>, vector<32x32xf32>
    %cst_8 = arith.constant dense<0.000000e+00> : vector<32x128xf32>
    %9 = tpu.matmul %8, %7, %cst_8 {dimension_numbers = #tpu.dot_dimension_numbers<[1], [0], [0], [1], [0, 0, 1, 1], [], []>} : vector<32x32xf32>, vector<32x128xf32>, vector<32x128xf32> -> vector<32x128xf32>
    %c0_9 = arith.constant 0 : index
    %c0_10 = arith.constant 0 : index
    %10 = vector.load %arg5[%c0_9, %c0_10] : memref<32x1xf32, #tpu.memory_space<vmem>>, vector<32x1xf32>
    %11 = vector.broadcast %10 : vector<32x1xf32> to vector<32x128xf32>
    %12 = arith.addf %9, %11 : vector<32x128xf32>
    %cst_11 = arith.constant 0.000000e+00 : f32
    %13 = vector.broadcast %cst_11 : f32 to vector<32x128xf32>
    %14 = arith.maximumf %12, %13 : vector<32x128xf32>
    %c0_12 = arith.constant 0 : index
    %c0_13 = arith.constant 0 : index
    %15 = vector.load %arg6[%c0_12, %c0_13] : memref<8x32xf32, #tpu.memory_space<vmem>>, vector<8x32xf32>
    %cst_14 = arith.constant dense<0.000000e+00> : vector<8x128xf32>
    %16 = tpu.matmul %15, %14, %cst_14 {dimension_numbers = #tpu.dot_dimension_numbers<[1], [0], [0], [1], [0, 0, 1, 1], [], []>} : vector<8x32xf32>, vector<32x128xf32>, vector<8x128xf32> -> vector<8x128xf32>
    %c0_15 = arith.constant 0 : index
    %c0_16 = arith.constant 0 : index
    %17 = vector.load %arg7[%c0_15, %c0_16] : memref<8x1xf32, #tpu.memory_space<vmem>>, vector<8x1xf32>
    %18 = vector.broadcast %17 : vector<8x1xf32> to vector<8x128xf32>
    %19 = arith.addf %16, %18 : vector<8x128xf32>
    %cst_17 = arith.constant dense<0xFF800000> : vector<128xf32>
    %20 = vector.multi_reduction <maximumf>, %19, %cst_17 [0] : vector<8x128xf32> to vector<128xf32>
    %21 = vector.shape_cast %20 : vector<128xf32> to vector<1x128xf32>
    %22 = vector.broadcast %21 : vector<1x128xf32> to vector<8x128xf32>
    %23 = arith.subf %19, %22 : vector<8x128xf32>
    %24 = math.exp %23 : vector<8x128xf32>
    %cst_18 = arith.constant dense<0.000000e+00> : vector<128xf32>
    %25 = vector.multi_reduction <add>, %24, %cst_18 [0] : vector<8x128xf32> to vector<128xf32>
    %26 = vector.shape_cast %25 : vector<128xf32> to vector<1x128xf32>
    %27 = vector.broadcast %26 : vector<1x128xf32> to vector<8x128xf32>
    %28 = arith.divf %24, %27 : vector<8x128xf32>
    %29 = tpu.transpose %28, [1, 0] : vector<8x128xf32> -> vector<128x8xf32>
    %c0_19 = arith.constant 0 : index
    %c0_20 = arith.constant 0 : index
    %30 = vector.load %arg8[%c0_19, %c0_20] : memref<128x8xf32, #tpu.memory_space<vmem>>, vector<128x8xf32>
    tpu.vector_store %arg8[%c0_19, %c0_20], %29 {strides = array<i32>} : memref<128x8xf32, #tpu.memory_space<vmem>>, vector<128x8xf32>,
    return
  }
  func.func @transform_0(%arg0: i32) -> (i32, i32) {
    %c0_i32 = arith.constant 0 : i32
    %c0_i32_0 = arith.constant 0 : i32
    return %arg0, %c0_i32 : i32, i32
  }
  func.func @transform_1(%arg0: i32) -> (i32, i32) {
    %c0_i32 = arith.constant 0 : i32
    %c0_i32_0 = arith.constant 0 : i32
    %c0_i32_1 = arith.constant 0 : i32
    return %c0_i32, %c0_i32_0 : i32, i32
  }
  func.func @transform_2(%arg0: i32) -> (i32, i32) {
    %c0_i32 = arith.constant 0 : i32
    %c0_i32_0 = arith.constant 0 : i32
    %c0_i32_1 = arith.constant 0 : i32
    return %c0_i32, %c0_i32_0 : i32, i32
  }
  func.func @transform_3(%arg0: i32) -> (i32, i32) {
    %c0_i32 = arith.constant 0 : i32
    %c0_i32_0 = arith.constant 0 : i32
    %c0_i32_1 = arith.constant 0 : i32
    return %c0_i32, %c0_i32_0 : i32, i32
  }
  func.func @transform_4(%arg0: i32) -> (i32, i32) {
    %c0_i32 = arith.constant 0 : i32
    %c0_i32_0 = arith.constant 0 : i32
    %c0_i32_1 = arith.constant 0 : i32
    return %c0_i32, %c0_i32_0 : i32, i32
  }
  func.func @transform_5(%arg0: i32) -> (i32, i32) {
    %c0_i32 = arith.constant 0 : i32
    %c0_i32_0 = arith.constant 0 : i32
    %c0_i32_1 = arith.constant 0 : i32
    return %c0_i32, %c0_i32_0 : i32, i32
  }
  func.func @transform_6(%arg0: i32) -> (i32, i32) {
    %c0_i32 = arith.constant 0 : i32
    %c0_i32_0 = arith.constant 0 : i32
    %c0_i32_1 = arith.constant 0 : i32
    return %c0_i32, %c0_i32_0 : i32, i32
  }
  func.func @transform_7(%arg0: i32) -> (i32, i32) {
    %c0_i32 = arith.constant 0 : i32
    %c0_i32_0 = arith.constant 0 : i32
    return %arg0, %c0_i32 : i32, i32
  }
}

</mosaic_0001>

<llo_original>
// kernel: tpu_custom_call.1
$region0: #{tpu_custom_call.1}
  #allocation0 [shape = 'u32[]', space=smem, size = 0x4, offset = 0x4, fixed_abs, tag = 'smem constant byte address 0x4 - core index']
  #allocation1 [shape = 'u32[144,128]{1,0:T(1,128)}', space=vmem, size = 0x12000, scoped, tag = 'internal scratch']
  %s0 = inlined_call_operand.vmem [shape: f32[128,16], index: 0, kind: input, shape index: {}]
  %s1 = inlined_call_operand.vmem [shape: f32[32,16], index: 1, kind: input, shape index: {}]
  %s2 = inlined_call_operand.vmem [shape: f32[32,1], index: 2, kind: input, shape index: {}]
  %s3 = inlined_call_operand.vmem [shape: f32[32,32], index: 3, kind: input, shape index: {}]
  %s4 = inlined_call_operand.vmem [shape: f32[32,1], index: 4, kind: input, shape index: {}]
  %s5 = inlined_call_operand.vmem [shape: f32[8,32], index: 5, kind: input, shape index: {}]
  %s6 = inlined_call_operand.vmem [shape: f32[8,1], index: 6, kind: input, shape index: {}]
  %s7 = inlined_call_operand.vmem [shape: f32[128,8], index: 7, kind: output, shape index: {}]
  %s8 = sld [smem:[#allocation0]]
  $region38: #{tpu_custom_call.1} parent=0
    _
  %s10 = ssub.s32 1, %s8
  %s11 = scalar_select 0, %s10, %s8
  // Predicated region
  $region2: #{tpu_custom_call.1} parent=0 // pred_check
    _
  $region3: #{tpu_custom_call.1} parent=0 // pred_check_branch
    %13 = sbr.rel (0) target = $region5
  $region4: #{tpu_custom_call.1} parent=0 // pred_region
    _
  $region5: #{tpu_custom_call.1} parent=0 // pred_fallthru
    _
  // Predicated region
  $region6: #{tpu_custom_call.1} parent=0 // pred_check
    _
  $region7: #{tpu_custom_call.1} parent=0 // pred_check_branch
    %15 = sbr.rel (0) target = $region9
  $region8: #{tpu_custom_call.1} parent=0 // pred_region
    _
  $region9: #{tpu_custom_call.1} parent=0 // pred_fallthru
    _
  // Predicated region
  $region10: #{tpu_custom_call.1} parent=0 // pred_check
    _
  $region11: #{tpu_custom_call.1} parent=0 // pred_check_branch
    %17 = sbr.rel (0) target = $region13
  $region12: #{tpu_custom_call.1} parent=0 // pred_region
    _
  $region13: #{tpu_custom_call.1} parent=0 // pred_fallthru
    _
  // Predicated region
  $region14: #{tpu_custom_call.1} parent=0 // pred_check
    _
  $region15: #{tpu_custom_call.1} parent=0 // pred_check_branch
    %19 = sbr.rel (0) target = $region17
  $region16: #{tpu_custom_call.1} parent=0 // pred_region
    _
  $region17: #{tpu_custom_call.1} parent=0 // pred_fallthru
    _
  // Predicated region
  $region18: #{tpu_custom_call.1} parent=0 // pred_check
    _
  $region19: #{tpu_custom_call.1} parent=0 // pred_check_branch
    %21 = sbr.rel (0) target = $region21
  $region20: #{tpu_custom_call.1} parent=0 // pred_region
    _
  $region21: #{tpu_custom_call.1} parent=0 // pred_fallthru
    _
  // Predicated region
  $region22: #{tpu_custom_call.1} parent=0 // pred_check
    _
  $region23: #{tpu_custom_call.1} parent=0 // pred_check_branch
    %23 = sbr.rel (0) target = $region25
  $region24: #{tpu_custom_call.1} parent=0 // pred_region
    _
  $region25: #{tpu_custom_call.1} parent=0 // pred_fallthru
    _
  // Predicated region
  $region26: #{tpu_custom_call.1} parent=0 // pred_check
    _
  $region27: #{tpu_custom_call.1} parent=0 // pred_check_branch
    %25 = sbr.rel (0) target = $region29
  $region28: #{tpu_custom_call.1} parent=0 // pred_region
    _
  $region29: #{tpu_custom_call.1} parent=0 // pred_fallthru
    _
  %v26 = vld [vmem:[%s0] sm:$0xff]
  %v27 = vld [vmem:[%s0 + $0x8] sm:$0xff]
  %v28 = vld [vmem:[%s0 + $0x10] sm:$0xff]
  %v29 = vld [vmem:[%s0 + $0x18] sm:$0xff]
  %v30 = vld [vmem:[%s0 + $0x20] sm:$0xff]
  %v31 = vld [vmem:[%s0 + $0x28] sm:$0xff]
  %v32 = vld [vmem:[%s0 + $0x30] sm:$0xff]
  %v33 = vld [vmem:[%s0 + $0x38] sm:$0xff]
  %v34 = vld [vmem:[%s0 + $0x40] sm:$0xff]
  %v35 = vld [vmem:[%s0 + $0x48] sm:$0xff]
  %v36 = vld [vmem:[%s0 + $0x50] sm:$0xff]
  %v37 = vld [vmem:[%s0 + $0x58] sm:$0xff]
  %v38 = vld [vmem:[%s0 + $0x60] sm:$0xff]
  %v39 = vld [vmem:[%s0 + $0x68] sm:$0xff]
  %v40 = vld [vmem:[%s0 + $0x70] sm:$0xff]
  %v41 = vld [vmem:[%s0 + $0x78] sm:$0xff]
  %v42 = vld [vmem:[%s1] sm:$0xff]
  %v43 = vld [vmem:[%s1 + $0x8] sm:$0xff]
  %v44 = vld [vmem:[%s1 + $0x10] sm:$0xff]
  %v45 = vld [vmem:[%s1 + $0x18] sm:$0xff]
  %v46 = vld [vmem:[%s2] sm:$0xff]
  %v47 = vld [vmem:[%s2 + $0x8] sm:$0xff]
  %v48 = vld [vmem:[%s2 + $0x10] sm:$0xff]
  %v49 = vld [vmem:[%s2 + $0x18] sm:$0xff]
  %51 = vset.pattern.permute.xlu0 0
  %52 = vperm.xlu0 %51, %v46
  %v53 = vpop.permute.xlu0 %52
  %56 = vset.pattern.permute.xlu0 0
  %57 = vperm.xlu0 %56, %v47
  %v58 = vpop.permute.xlu0 %57
  %61 = vset.pattern.permute.xlu0 0
  %62 = vperm.xlu0 %61, %v48
  %v63 = vpop.permute.xlu0 %62
  %66 = vset.pattern.permute.xlu0 0
  %67 = vperm.xlu0 %66, %v49
  %v68 = vpop.permute.xlu0 %67
  %vm70 = vcmask 130048
  %v72 = vsel %vm70, %v42, 0
  %v75 = vsel %vm70, %v43, 0
  %v78 = vsel %vm70, %v44, 0
  %v81 = vsel %vm70, %v45, 0
  %v84 = vsel %vm70, %v26, 0
  %v87 = vsel %vm70, %v27, 0
  %v90 = vsel %vm70, %v28, 0
  %v93 = vsel %vm70, %v29, 0
  %v96 = vsel %vm70, %v30, 0
  %v99 = vsel %vm70, %v31, 0
  %v102 = vsel %vm70, %v32, 0
  %v105 = vsel %vm70, %v33, 0
  %v108 = vsel %vm70, %v34, 0
  %v111 = vsel %vm70, %v35, 0
  %v114 = vsel %vm70, %v36, 0
  %v117 = vsel %vm70, %v37, 0
  %v120 = vsel %vm70, %v38, 0
  %v123 = vsel %vm70, %v39, 0
  %v126 = vsel %vm70, %v40, 0
  %v129 = vsel %vm70, %v41, 0
  %131 = vmatprep.subr.mxu0 0.0
  %132 = vmatpush1.xpose.msra.mxu0 %v84
  %133 = vmatprep.subr.mxu0 0.0
  %134 = vmatpush1.xpose.msra.mxu0 %v87
  %135 = vmatprep.subr.mxu0 0.0
  %136 = vmatpush1.xpose.msra.mxu0 %v90
  %137 = vmatprep.subr.mxu0 0.0
  %138 = vmatpush1.xpose.msra.mxu0 %v93
  %139 = vmatprep.subr.mxu0 0.0
  %140 = vmatpush1.xpose.msra.mxu0 %v96
  %141 = vmatprep.subr.mxu0 0.0
  %142 = vmatpush1.xpose.msra.mxu0 %v99
  %143 = vmatprep.subr.mxu0 0.0
  %144 = vmatpush1.xpose.msra.mxu0 %v102
  %145 = vmatprep.subr.mxu0 0.0
  %146 = vmatpush1.xpose.msra.mxu0 %v105
  %147 = vmatprep.subr.mxu0 0.0
  %148 = vmatpush1.xpose.msra.mxu0 %v108
  %149 = vmatprep.subr.mxu0 0.0
  %150 = vmatpush1.xpose.msra.mxu0 %v111
  %151 = vmatprep.subr.mxu0 0.0
  %152 = vmatpush1.xpose.msra.mxu0 %v114
  %153 = vmatprep.subr.mxu0 0.0
  %154 = vmatpush1.xpose.msra.mxu0 %v117
  %155 = vmatprep.subr.mxu0 0.0
  %156 = vmatpush1.xpose.msra.mxu0 %v120
  %157 = vmatprep.subr.mxu0 0.0
  %158 = vmatpush1.xpose.msra.mxu0 %v123
  %159 = vmatprep.subr.mxu0 0.0
  %160 = vmatpush1.xpose.msra.mxu0 %v126
  %161 = vmatprep.subr.mxu0 0.0
  %162 = vmatpush1.xpose.msra.mxu0 %v129
  %163 = vmatprep.subr.mxu0 0.0
  %164 = vmatpush1.xpose.msra.mxu0 0.0
  %165 = vmatprep.subr.mxu0 0.0
  %166 = vmatpush1.xpose.msra.mxu0 0.0
  %167 = vmatprep.subr.mxu0 0.0
  %168 = vmatpush1.xpose.msra.mxu0 0.0
  %169 = vmatprep.subr.mxu0 0.0
  %170 = vmatpush1.xpose.msra.mxu0 0.0
  %171 = vmatprep.subr.mxu0 0.0
  %172 = vmatpush1.xpose.msra.mxu0 0.0
  %173 = vmatprep.subr.mxu0 0.0
  %174 = vmatpush1.xpose.msra.mxu0 0.0
  %175 = vmatprep.subr.mxu0 0.0
  %176 = vmatpush1.xpose.msra.mxu0 0.0
  %177 = vmatprep.subr.mxu0 0.0
  %178 = vmatpush1.xpose.msra.mxu0 0.0
  %179 = vmatprep.subr.mxu0 0.0
  %180 = vmatpush1.xpose.msra.mxu0 0.0
  %181 = vmatprep.subr.mxu0 0.0
  %182 = vmatpush1.xpose.msra.mxu0 0.0
  %183 = vmatprep.subr.mxu0 0.0
  %184 = vmatpush1.xpose.msra.mxu0 0.0
  %185 = vmatprep.subr.mxu0 0.0
  %186 = vmatpush1.xpose.msra.mxu0 0.0
  %187 = vmatprep.subr.mxu0 0.0
  %188 = vmatpush1.xpose.msra.mxu0 0.0
  %189 = vmatprep.subr.mxu0 0.0
  %190 = vmatpush1.xpose.msra.mxu0 0.0
  %191 = vmatprep.subr.mxu0 0.0
  %192 = vmatpush1.xpose.msra.mxu0 0.0
  %193 = vmatprep.subr.mxu0 0.0
  %194 = vmatpush1.xpose.msra.mxu0 0.0
  %195 = vmatprep.mubr.f32.mxu0 0.0
  %196 = vmatmul.mubr.f32.gmra.mrb[0].mxu0 %v72
  %v197 = vpop.f32.mrb[0].mxu0
  %v198 = vadd.f32 %v53, %v197
  %v199 = vpop.f32.mrb[0].mxu0
  %200 = vmatprep.mubr.f32.mxu0 0.0
  %201 = vmatmul.mubr.f32.gmra.mrb[0].mxu0 %v75
  %v202 = vpop.f32.mrb[0].mxu0
  %v203 = vadd.f32 %v58, %v202
  %v204 = vpop.f32.mrb[0].mxu0
  %205 = vmatprep.mubr.f32.mxu0 0.0
  %206 = vmatmul.mubr.f32.gmra.mrb[0].mxu0 %v78
  %v207 = vpop.f32.mrb[0].mxu0
  %v208 = vadd.f32 %v63, %v207
  %v209 = vpop.f32.mrb[0].mxu0
  %210 = vmatprep.mubr.f32.mxu0 0.0
  %211 = vmatmul.mubr.f32.gmra.mrb[0].mxu0 %v81
  %v212 = vpop.f32.mrb[0].mxu0
  %v213 = vadd.f32 %v68, %v212
  %v214 = vpop.f32.mrb[0].mxu0
  %215 = vdwg.mxu0
  %v216 = vmax.f32 %v198, 0.0
  %v217 = vmax.f32 %v203, 0.0
  %v218 = vmax.f32 %v208, 0.0
  %v219 = vmax.f32 %v213, 0.0
  %v220 = vld [vmem:[%s3] sm:$0xff]
  %v221 = vld [vmem:[%s3 + $0x8] sm:$0xff]
  %v222 = vld [vmem:[%s3 + $0x10] sm:$0xff]
  %v223 = vld [vmem:[%s3 + $0x18] sm:$0xff]
  %v224 = vld [vmem:[%s4] sm:$0xff]
  %v225 = vld [vmem:[%s4 + $0x8] sm:$0xff]
  %v226 = vld [vmem:[%s4 + $0x10] sm:$0xff]
  %v227 = vld [vmem:[%s4 + $0x18] sm:$0xff]
  %229 = vset.pattern.permute.xlu0 0
  %230 = vperm.xlu0 %229, %v224
  %v231 = vpop.permute.xlu0 %230
  %234 = vset.pattern.permute.xlu0 0
  %235 = vperm.xlu0 %234, %v225
  %v236 = vpop.permute.xlu0 %235
  %239 = vset.pattern.permute.xlu0 0
  %240 = vperm.xlu0 %239, %v226
  %v241 = vpop.permute.xlu0 %240
  %244 = vset.pattern.permute.xlu0 0
  %245 = vperm.xlu0 %244, %v227
  %v246 = vpop.permute.xlu0 %245
  %vm248 = vcmask 261120
  %v250 = vsel %vm248, %v220, 0
  %v253 = vsel %vm248, %v221, 0
  %v256 = vsel %vm248, %v222, 0
  %v259 = vsel %vm248, %v223, 0
  %261 = vmatprep.subr.mxu0 0.0
  %262 = vmatpush1.msra.mxu0 %v216
  %263 = vmatprep.subr.mxu0 0.0
  %264 = vmatpush1.msra.mxu0 %v217
  %265 = vmatprep.subr.mxu0 0.0
  %266 = vmatpush1.msra.mxu0 %v218
  %267 = vmatprep.subr.mxu0 0.0
  %268 = vmatpush1.msra.mxu0 %v219
  %269 = vmatprep.subr.mxu0 0.0
  %270 = vmatpush1.msra.mxu0 0.0
  %271 = vmatprep.subr.mxu0 0.0
  %272 = vmatpush1.msra.mxu0 0.0
  %273 = vmatprep.subr.mxu0 0.0
  %274 = vmatpush1.msra.mxu0 0.0
  %275 = vmatprep.subr.mxu0 0.0
  %276 = vmatpush1.msra.mxu0 0.0
  %277 = vmatprep.subr.mxu0 0.0
  %278 = vmatpush1.msra.mxu0 0.0
  %279 = vmatprep.subr.mxu0 0.0
  %280 = vmatpush1.msra.mxu0 0.0
  %281 = vmatprep.subr.mxu0 0.0
  %282 = vmatpush1.msra.mxu0 0.0
  %283 = vmatprep.subr.mxu0 0.0
  %284 = vmatpush1.msra.mxu0 0.0
  %285 = vmatprep.subr.mxu0 0.0
  %286 = vmatpush1.msra.mxu0 0.0
  %287 = vmatprep.subr.mxu0 0.0
  %288 = vmatpush1.msra.mxu0 0.0
  %289 = vmatprep.subr.mxu0 0.0
  %290 = vmatpush1.msra.mxu0 0.0
  %291 = vmatprep.subr.mxu0 0.0
  %292 = vmatpush1.msra.mxu0 0.0
  %293 = vmatprep.subr.mxu0 0.0
  %294 = vmatpush1.msra.mxu0 0.0
  %295 = vmatprep.subr.mxu0 0.0
  %296 = vmatpush1.msra.mxu0 0.0
  %297 = vmatprep.subr.mxu0 0.0
  %298 = vmatpush1.msra.mxu0 0.0
  %299 = vmatprep.subr.mxu0 0.0
  %300 = vmatpush1.msra.mxu0 0.0
  %301 = vmatprep.subr.mxu0 0.0
  %302 = vmatpush1.msra.mxu0 0.0
  %303 = vmatprep.subr.mxu0 0.0
  %304 = vmatpush1.msra.mxu0 0.0
  %305 = vmatprep.subr.mxu0 0.0
  %306 = vmatpush1.msra.mxu0 0.0
  %307 = vmatprep.subr.mxu0 0.0
  %308 = vmatpush1.msra.mxu0 0.0
  %309 = vmatprep.subr.mxu0 0.0
  %310 = vmatpush1.msra.mxu0 0.0
  %311 = vmatprep.subr.mxu0 0.0
  %312 = vmatpush1.msra.mxu0 0.0
  %313 = vmatprep.subr.mxu0 0.0
  %314 = vmatpush1.msra.mxu0 0.0
  %315 = vmatprep.subr.mxu0 0.0
  %316 = vmatpush1.msra.mxu0 0.0
  %317 = vmatprep.subr.mxu0 0.0
  %318 = vmatpush1.msra.mxu0 0.0
  %319 = vmatprep.subr.mxu0 0.0
  %320 = vmatpush1.msra.mxu0 0.0
  %321 = vmatprep.subr.mxu0 0.0
  %322 = vmatpush1.msra.mxu0 0.0
  %323 = vmatprep.subr.mxu0 0.0
  %324 = vmatpush1.msra.mxu0 0.0
  %325 = vmatprep.mubr.f32.mxu0 0.0
  %326 = vmatmul.mubr.f32.gmra.mrb[0].mxu0 %v250
  %v327 = vpop.f32.mrb[0].mxu0
  %v328 = vadd.f32 %v231, %v327
  %v329 = vpop.f32.mrb[0].mxu0
  %330 = vmatprep.mubr.f32.mxu0 0.0
  %331 = vmatmul.mubr.f32.gmra.mrb[0].mxu0 %v253
  %v332 = vpop.f32.mrb[0].mxu0
  %v333 = vadd.f32 %v236, %v332
  %v334 = vpop.f32.mrb[0].mxu0
  %335 = vmatprep.mubr.f32.mxu0 0.0
  %336 = vmatmul.mubr.f32.gmra.mrb[0].mxu0 %v256
  %v337 = vpop.f32.mrb[0].mxu0
  %v338 = vadd.f32 %v241, %v337
  %v339 = vpop.f32.mrb[0].mxu0
  %340 = vmatprep.mubr.f32.mxu0 0.0
  %341 = vmatmul.mubr.f32.gmra.mrb[0].mxu0 %v259
  %v342 = vpop.f32.mrb[0].mxu0
  %v343 = vadd.f32 %v246, %v342
  %v344 = vpop.f32.mrb[0].mxu0
  %345 = vdwg.mxu0
  %v346 = vmax.f32 %v328, 0.0
  %v347 = vmax.f32 %v333, 0.0
  %v348 = vmax.f32 %v338, 0.0
  %v349 = vmax.f32 %v343, 0.0
  %v350 = vld [vmem:[%s5] sm:$0xff]
  %v351 = vld [vmem:[%s6] sm:$0xff]
  %353 = vset.pattern.permute.xlu0 0
  %354 = vperm.xlu0 %353, %v351
  %v355 = vpop.permute.xlu0 %354
  %v358 = vsel %vm248, %v350, 0
  %360 = vmatprep.subr.mxu0 0.0
  %361 = vmatpush1.msra.mxu0 %v346
  %362 = vmatprep.subr.mxu0 0.0
  %363 = vmatpush1.msra.mxu0 %v347
  %364 = vmatprep.subr.mxu0 0.0
  %365 = vmatpush1.msra.mxu0 %v348
  %366 = vmatprep.subr.mxu0 0.0
  %367 = vmatpush1.msra.mxu0 %v349
  %368 = vmatprep.subr.mxu0 0.0
  %369 = vmatpush1.msra.mxu0 0.0
  %370 = vmatprep.subr.mxu0 0.0
  %371 = vmatpush1.msra.mxu0 0.0
  %372 = vmatprep.subr.mxu0 0.0
  %373 = vmatpush1.msra.mxu0 0.0
  %374 = vmatprep.subr.mxu0 0.0
  %375 = vmatpush1.msra.mxu0 0.0
  %376 = vmatprep.subr.mxu0 0.0
  %377 = vmatpush1.msra.mxu0 0.0
  %378 = vmatprep.subr.mxu0 0.0
  %379 = vmatpush1.msra.mxu0 0.0
  %380 = vmatprep.subr.mxu0 0.0
  %381 = vmatpush1.msra.mxu0 0.0
  %382 = vmatprep.subr.mxu0 0.0
  %383 = vmatpush1.msra.mxu0 0.0
  %384 = vmatprep.subr.mxu0 0.0
  %385 = vmatpush1.msra.mxu0 0.0
  %386 = vmatprep.subr.mxu0 0.0
  %387 = vmatpush1.msra.mxu0 0.0
  %388 = vmatprep.subr.mxu0 0.0
  %389 = vmatpush1.msra.mxu0 0.0
  %390 = vmatprep.subr.mxu0 0.0
  %391 = vmatpush1.msra.mxu0 0.0
  %392 = vmatprep.subr.mxu0 0.0
  %393 = vmatpush1.msra.mxu0 0.0
  %394 = vmatprep.subr.mxu0 0.0
  %395 = vmatpush1.msra.mxu0 0.0
  %396 = vmatprep.subr.mxu0 0.0
  %397 = vmatpush1.msra.mxu0 0.0
  %398 = vmatprep.subr.mxu0 0.0
  %399 = vmatpush1.msra.mxu0 0.0
  %400 = vmatprep.subr.mxu0 0.0
  %401 = vmatpush1.msra.mxu0 0.0
  %402 = vmatprep.subr.mxu0 0.0
  %403 = vmatpush1.msra.mxu0 0.0
  %404 = vmatprep.subr.mxu0 0.0
  %405 = vmatpush1.msra.mxu0 0.0
  %406 = vmatprep.subr.mxu0 0.0
  %407 = vmatpush1.msra.mxu0 0.0
  %408 = vmatprep.subr.mxu0 0.0
  %409 = vmatpush1.msra.mxu0 0.0
  %410 = vmatprep.subr.mxu0 0.0
  %411 = vmatpush1.msra.mxu0 0.0
  %412 = vmatprep.subr.mxu0 0.0
  %413 = vmatpush1.msra.mxu0 0.0
  %414 = vmatprep.subr.mxu0 0.0
  %415 = vmatpush1.msra.mxu0 0.0
  %416 = vmatprep.subr.mxu0 0.0
  %417 = vmatpush1.msra.mxu0 0.0
  %418 = vmatprep.subr.mxu0 0.0
  %419 = vmatpush1.msra.mxu0 0.0
  %420 = vmatprep.subr.mxu0 0.0
  %421 = vmatpush1.msra.mxu0 0.0
  %422 = vmatprep.subr.mxu0 0.0
  %423 = vmatpush1.msra.mxu0 0.0
  %424 = vmatprep.mubr.f32.mxu0 0.0
  %425 = vmatmul.mubr.f32.gmra.mrb[0].mxu0 %v358
  %v426 = vpop.f32.mrb[0].mxu0
  %v427 = vadd.f32 %v355, %v426
  %v428 = vpop.f32.mrb[0].mxu0
  %429 = vdwg.mxu0
  %v430 = vrot.slane %v427, 4
  %v431 = vmax.f32 %v427, %v430
  %v432 = vrot.slane %v431, 2
  %v433 = vmax.f32 %v431, %v432
  %v434 = vrot.slane %v433, 1
  %v435 = vmax.f32 %v433, %v434
  %v436 = vsub.f32 %v427, %v435
  %v437 = vmul.f32 %v436, 1.442695
  %v438 = vpow.pop %v437
  %v439 = vrot.slane %v438, 4
  %v440 = vadd.f32 %v438, %v439
  %v441 = vrot.slane %v440, 2
  %v442 = vadd.f32 %v440, %v441
  %v443 = vrot.slane %v442, 1
  %v444 = vadd.f32 %v442, %v443
  %v445 = vrcp.pop %v444
  %v446 = vmul.f32 %v438, %v445
  %447 = vxpose.xlu0.b32.start [1/16] %v446, 128
  %448 = vxpose.xlu0.b32.cont [2/16] 0.0, 128
  %449 = vxpose.xlu0.b32.cont [3/16] 0.0, 128
  %450 = vxpose.xlu0.b32.cont [4/16] 0.0, 128
  %451 = vxpose.xlu0.b32.cont [5/16] 0.0, 128
  %452 = vxpose.xlu0.b32.cont [6/16] 0.0, 128
  %453 = vxpose.xlu0.b32.cont [7/16] 0.0, 128
  %454 = vxpose.xlu0.b32.cont [8/16] 0.0, 128
  %455 = vxpose.xlu0.b32.cont [9/16] 0.0, 128
  %456 = vxpose.xlu0.b32.cont [10/16] 0.0, 128
  %457 = vxpose.xlu0.b32.cont [11/16] 0.0, 128
  %458 = vxpose.xlu0.b32.cont [12/16] 0.0, 128
  %459 = vxpose.xlu0.b32.cont [13/16] 0.0, 128
  %460 = vxpose.xlu0.b32.cont [14/16] 0.0, 128
  %461 = vxpose.xlu0.b32.cont [15/16] 0.0, 128
  %462 = vxpose.xlu0.b32.end [16/16] 0.0, 128
  %v463 = vpop.trf.xlu0
  %v464 = vpop.trf.xlu0
  %v465 = vpop.trf.xlu0
  %v466 = vpop.trf.xlu0
  %v467 = vpop.trf.xlu0
  %v468 = vpop.trf.xlu0
  %v469 = vpop.trf.xlu0
  %v470 = vpop.trf.xlu0
  %v471 = vpop.trf.xlu0
  %v472 = vpop.trf.xlu0
  %v473 = vpop.trf.xlu0
  %v474 = vpop.trf.xlu0
  %v475 = vpop.trf.xlu0
  %v476 = vpop.trf.xlu0
  %v477 = vpop.trf.xlu0
  %v478 = vpop.trf.xlu0
  %vm479 = vcmask 64512
  %480 = vst.msk [vmem:[%s7] sm:$0xff] %vm479, %v463
  %481 = vst.msk [vmem:[%s7 + $0x8] sm:$0xff] %vm479, %v464
  %482 = vst.msk [vmem:[%s7 + $0x10] sm:$0xff] %vm479, %v465
  %483 = vst.msk [vmem:[%s7 + $0x18] sm:$0xff] %vm479, %v466
  %484 = vst.msk [vmem:[%s7 + $0x20] sm:$0xff] %vm479, %v467
  %485 = vst.msk [vmem:[%s7 + $0x28] sm:$0xff] %vm479, %v468
  %486 = vst.msk [vmem:[%s7 + $0x30] sm:$0xff] %vm479, %v469
  %487 = vst.msk [vmem:[%s7 + $0x38] sm:$0xff] %vm479, %v470
  %488 = vst.msk [vmem:[%s7 + $0x40] sm:$0xff] %vm479, %v471
  %489 = vst.msk [vmem:[%s7 + $0x48] sm:$0xff] %vm479, %v472
  %490 = vst.msk [vmem:[%s7 + $0x50] sm:$0xff] %vm479, %v473
  %491 = vst.msk [vmem:[%s7 + $0x58] sm:$0xff] %vm479, %v474
  %492 = vst.msk [vmem:[%s7 + $0x60] sm:$0xff] %vm479, %v475
  %493 = vst.msk [vmem:[%s7 + $0x68] sm:$0xff] %vm479, %v476
  %494 = vst.msk [vmem:[%s7 + $0x70] sm:$0xff] %vm479, %v477
  %495 = vst.msk [vmem:[%s7 + $0x78] sm:$0xff] %vm479, %v478
  // Predicated region
  $region30: #{tpu_custom_call.1} parent=0 // pred_check
    _
  $region31: #{tpu_custom_call.1} parent=0 // pred_check_branch
    %497 = sbr.rel (0) target = $region33
  $region32: #{tpu_custom_call.1} parent=0 // pred_region
    _
  $region33: #{tpu_custom_call.1} parent=0 // pred_fallthru
    _
  // Predicated region
  $region34: #{tpu_custom_call.1} parent=0 // pred_check
    _
  $region35: #{tpu_custom_call.1} parent=0 // pred_check_branch
    %499 = sbr.rel (0) target = $region37
  $region36: #{tpu_custom_call.1} parent=0 // pred_region
    _
  $region37: #{tpu_custom_call.1} parent=0 // pred_fallthru
    _

</llo_original>
